<compile_context>
chip_gen: v5e
topology: v5e:2x2
jax: 0.10.0
libtpu: 0.0.40
codegen_flags: <defaults>
</compile_context>

<pallas_src>
import functools
import math

import jax
import jax.numpy as jnp
import numpy as np
from jax.experimental import pallas as pl
from jax.experimental.pallas import tpu as pltpu

# ----------------------------- configuration --------------------------------
X_DIM = 3
Z_DIM = 16
R_DIM = 16            # deterministic_path = True
H_DIM = 32
Y_DIM = 2
BATCH = 2
NUM_POINTS = 8
LIKELIHOOD_STD_BIAS = 0.1
# likelihood_std is None -> learned sigma head (the richer branch of the module)


# ------------------------------ fused Pallas kernel --------------------------
def _decoder_kernel(xsel_ref, zcat_ref, w1_ref, wstack_ref, whead_ref, bpack_ref,
                    out_ref, w1aug, *, x_dim, zr_dim, y_dim):
    """Whole Decoder forward for the full (B*N) row slab in one invocation.

    xsel_ref : (B*N, x_dim + B)  rows = [x_i | onehot(batch_of_i)]
    zcat_ref : (B, z_dim + r_dim) rows = [z_b | r_b]
    w1_ref   : (z_dim + r_dim + x_dim, H)  rows = [w1z ; w1r ; w1x]  (8-aligned slices)
    wstack_ref : (3, H, H)   stacked [w2, w3, w4]
    whead_ref  : (H, 2*y_dim) fused [w_mu | w_sigma]
    bpack_ref  : (5, H)      rows = [b1, b2, b3, b4, b_head (padded to H)]
    out_ref    : (B*N, 2*y_dim)  cols = [mu | sigma]
    w1aug      : VMEM scratch (x_dim + B, H)
    """
    # Per-batch first-layer contribution of [z | r]; bias b1 folded in exactly once.
    zr = (jnp.dot(zcat_ref[...], w1_ref[0:zr_dim, :],
                  preferred_element_type=jnp.float32)
          + bpack_ref[0:1, :])                                   # (B, H)

    # Augmented first-layer weight [w1x ; zr]: one dot against [x | onehot(b)] yields
    # x@w1x + zr[batch(row)] (replaces the previous one-hot selector matmul).
    w1aug[0:x_dim, :] = w1_ref[zr_dim:, :]                       # w1x (offset 32, aligned)
    w1aug[x_dim:, :] = zr

    # xz_to_hidden = _mlp([in] + [h]*4), then torch.relu in forward()
    h = jnp.maximum(
        jnp.dot(xsel_ref[...], w1aug[...], preferred_element_type=jnp.float32), 0.0)
    h = jnp.maximum(
        jnp.dot(h, wstack_ref[0], preferred_element_type=jnp.float32)
        + bpack_ref[1:2, :], 0.0)
    h = jnp.maximum(
        jnp.dot(h, wstack_ref[1], preferred_element_type=jnp.float32)
        + bpack_ref[2:3, :], 0.0)
    h = jnp.maximum(
        jnp.dot(h, wstack_ref[2], preferred_element_type=jnp.float32)
        + bpack_ref[3:4, :], 0.0)

    # Fused mu / pre_sigma heads: one (H, 2*y_dim) matmul.
    heads = (jnp.dot(h, whead_ref[...], preferred_element_type=jnp.float32)
             + bpack_ref[4:5, 0:2 * y_dim])                      # (B*N, 2*y_dim)

    # sigma lanes (>= y_dim): 0.1 + 0.9*softplus ; mu lanes pass through.
    # Stable softplus: max(x,0) + log(1 + exp(-|x|)); evaluating it on mu lanes is
    # free (EUP slot) and discarded by the where.
    sp = jnp.maximum(heads, 0.0) + jnp.log(1.0 + jnp.exp(-jnp.abs(heads)))
    lane = jax.lax.broadcasted_iota(jnp.int32, heads.shape, 1)
    out_ref[...] = jnp.where(lane < y_dim, heads,
                             LIKELIHOOD_STD_BIAS + 0.9 * sp)


# ------------------------------ wrapper --------------------------------------
def decoder_forward(x, z, r, packed):
    """x: (B, N, x_dim), z: (B, z_dim), r: (B, r_dim) -> (mu, sigma), each (B, N, y_dim)."""
    B, N, _ = x.shape
    x_flat = x.reshape(B * N, X_DIM)

    # Constant one-hot batch selector appended to x (compile-time constant data).
    sel = jnp.asarray(np.repeat(np.eye(B, dtype=np.float32), N, axis=0))  # (B*N, B)
    xsel = jnp.concatenate([x_flat, sel], axis=-1)                         # (B*N, X+B)
    zcat = jnp.concatenate([z, r], axis=-1)                                # (B, Z+R)

    kernel = functools.partial(_decoder_kernel,
                               x_dim=X_DIM, zr_dim=Z_DIM + R_DIM, y_dim=Y_DIM)
    vmem = pl.BlockSpec(memory_space=pltpu.MemorySpace.VMEM)

    out = pl.pallas_call(
        kernel,
        out_shape=jax.ShapeDtypeStruct((B * N, 2 * Y_DIM), jnp.float32),
        in_specs=[vmem] * 6,
        out_specs=vmem,
        scratch_shapes=[pltpu.VMEM((X_DIM + B, H_DIM), jnp.float32)],
    )(xsel, zcat, packed["w1"], packed["w_stack"], packed["w_head"], packed["b_pack"])

    mu = out[:, :Y_DIM].reshape(B, N, Y_DIM)
    sigma = out[:, Y_DIM:].reshape(B, N, Y_DIM)
    return mu, sigma


# ------------------------------ reference (pure JAX) --------------------------
def _ref_forward(x, z, r, p):
    B, N, _ = x.shape
    z_rep = jnp.broadcast_to(z[:, None, :], (B, N, Z_DIM))
    r_rep = jnp.broadcast_to(r[:, None, :], (B, N, R_DIM))
    inp = jnp.concatenate([x, z_rep, r_rep], axis=-1).reshape(B * N, -1)

    w1 = jnp.concatenate([p["w1x"], p["w1z"], p["w1r"]], axis=0)
    h = jax.nn.relu(inp @ w1 + p["b1"])
    h = jax.nn.relu(h @ p["w2"] + p["b2"])
    h = jax.nn.relu(h @ p["w3"] + p["b3"])
    h = jax.nn.relu(h @ p["w4"] + p["b4"])

    mu = (h @ p["w_mu"] + p["b_mu"]).reshape(B, N, Y_DIM)
    pre_sigma = (h @ p["w_sigma"] + p["b_sigma"]).reshape(B, N, Y_DIM)
    sigma = LIKELIHOOD_STD_BIAS + 0.9 * jax.nn.softplus(pre_sigma)
    return mu, sigma


# ------------------------------ params ---------------------------------------
def init_params(key):
    def dense(k, fan_in, fan_out):
        return jax.random.normal(k, (fan_in, fan_out), jnp.float32) * (1.0 / math.sqrt(fan_in))

    keys = jax.random.split(key, 16)
    return {
        # first MLP layer, split along the concatenated input dim (x | z | r)
        "w1x": dense(keys[0], X_DIM, H_DIM),
        "w1z": dense(keys[1], Z_DIM, H_DIM),
        "w1r": dense(keys[2], R_DIM, H_DIM),
        "b1": 0.1 * jax.random.normal(keys[8], (1, H_DIM), jnp.float32),
        # remaining MLP layers
        "w2": dense(keys[3], H_DIM, H_DIM),
        "b2": 0.1 * jax.random.normal(keys[9], (1, H_DIM), jnp.float32),
        "w3": dense(keys[4], H_DIM, H_DIM),
        "b3": 0.1 * jax.random.normal(keys[10], (1, H_DIM), jnp.float32),
        "w4": dense(keys[5], H_DIM, H_DIM),
        "b4": 0.1 * jax.random.normal(keys[11], (1, H_DIM), jnp.float32),
        # heads
        "w_mu": dense(keys[6], H_DIM, Y_DIM),
        "b_mu": 0.1 * jax.random.normal(keys[12], (1, Y_DIM), jnp.float32),
        "w_sigma": dense(keys[7], H_DIM, Y_DIM),
        "b_sigma": 0.1 * jax.random.normal(keys[13], (1, Y_DIM), jnp.float32),
    }


def pack_params(p):
    """One-time packing of the 15 logical tensors into 4 kernel inputs."""
    # [w1z ; w1r ; w1x] -> slices used in-kernel start at 8-aligned sublane offsets.
    w1 = jnp.concatenate([p["w1z"], p["w1r"], p["w1x"]], axis=0)          # (Z+R+X, H)
    w_stack = jnp.stack([p["w2"], p["w3"], p["w4"]], axis=0)              # (3, H, H)
    w_head = jnp.concatenate([p["w_mu"], p["w_sigma"]], axis=1)           # (H, 2Y)
    b_head = jnp.concatenate([p["b_mu"], p["b_sigma"]], axis=1)           # (1, 2Y)
    b_head_pad = jnp.pad(b_head, ((0, 0), (0, H_DIM - 2 * Y_DIM)))        # (1, H)
    b_pack = jnp.concatenate(
        [p["b1"], p["b2"], p["b3"], p["b4"], b_head_pad], axis=0)         # (5, H)
    return {"w1": w1, "w_stack": w_stack, "w_head": w_head, "b_pack": b_pack}


# ------------------------------ main ------------------------------------------
if __name__ == "__main__":
    root = jax.random.PRNGKey(0)
    kx, kz, kr, kp = jax.random.split(root, 4)
    x = jax.random.normal(kx, (BATCH, NUM_POINTS, X_DIM), jnp.float32)
    z = jax.random.normal(kz, (BATCH, Z_DIM), jnp.float32)
    r = jax.random.normal(kr, (BATCH, R_DIM), jnp.float32)
    params = init_params(kp)
    packed = pack_params(params)

    mu, sigma = decoder_forward(x, z, r, packed)
    mu = jax.block_until_ready(mu)
    sigma = jax.block_until_ready(sigma)

    mu_ref, sigma_ref = _ref_forward(x, z, r, params)
    mu_ref = jax.block_until_ready(mu_ref)
    sigma_ref = jax.block_until_ready(sigma_ref)

    np.testing.assert_allclose(np.asarray(mu), np.asarray(mu_ref), rtol=1e-4, atol=1e-4)
    np.testing.assert_allclose(np.asarray(sigma), np.asarray(sigma_ref), rtol=1e-4, atol=1e-4)
    assert mu.shape == (BATCH, NUM_POINTS, Y_DIM)
    assert sigma.shape == (BATCH, NUM_POINTS, Y_DIM)
    assert bool(jnp.all(sigma > 0.0))

    print("KERNEL_OK")
</pallas_src>

<mosaic_0001>
module attributes {stable_mosaic.version = 11 : i64} {
  func.func @_decoder_kernel(%arg0: memref<16x5xf32, #tpu.memory_space<vmem>>, %arg1: memref<2x32xf32, #tpu.memory_space<vmem>>, %arg2: memref<35x32xf32, #tpu.memory_space<vmem>>, %arg3: memref<3x32x32xf32, #tpu.memory_space<vmem>>, %arg4: memref<32x4xf32, #tpu.memory_space<vmem>>, %arg5: memref<5x32xf32, #tpu.memory_space<vmem>>, %arg6: memref<16x4xf32, #tpu.memory_space<vmem>>, %arg7: memref<5x32xf32, #tpu.memory_space<vmem>>) attributes {dimension_semantics = [], scalar_prefetch = 0 : i64, scratch_operands = 1 : i64, tpu.core_type = #tpu.core_type<tc>} {
    %c0 = arith.constant 0 : index
    %c0_0 = arith.constant 0 : index
    %0 = vector.load %arg1[%c0, %c0_0] : memref<2x32xf32, #tpu.memory_space<vmem>>, vector<2x32xf32>
    %c0_1 = arith.constant 0 : index
    %c0_2 = arith.constant 0 : index
    %1 = vector.load %arg2[%c0_1, %c0_2] : memref<35x32xf32, #tpu.memory_space<vmem>>, vector<32x32xf32>
    %cst = arith.constant dense<0.000000e+00> : vector<2x32xf32>
    %2 = tpu.matmul %0, %1, %cst {dimension_numbers = #tpu.dot_dimension_numbers<[1], [0], [0], [1], [0, 0, 1, 1], [], []>} : vector<2x32xf32>, vector<32x32xf32>, vector<2x32xf32> -> vector<2x32xf32>
    %c0_3 = arith.constant 0 : index
    %c0_4 = arith.constant 0 : index
    %3 = vector.load %arg5[%c0_3, %c0_4] : memref<5x32xf32, #tpu.memory_space<vmem>>, vector<1x32xf32>
    %4 = vector.broadcast %3 : vector<1x32xf32> to vector<2x32xf32>
    %5 = arith.addf %2, %4 : vector<2x32xf32>
    %c32 = arith.constant 32 : index
    %c0_5 = arith.constant 0 : index
    %6 = vector.load %arg2[%c32, %c0_5] : memref<35x32xf32, #tpu.memory_space<vmem>>, vector<3x32xf32>
    %c0_6 = arith.constant 0 : index
    %c0_7 = arith.constant 0 : index
    %7 = vector.load %arg7[%c0_6, %c0_7] : memref<5x32xf32, #tpu.memory_space<vmem>>, vector<3x32xf32>
    tpu.vector_store %arg7[%c0_6, %c0_7], %6 {strides = array<i32>} : memref<5x32xf32, #tpu.memory_space<vmem>>, vector<3x32xf32>,
    %c3 = arith.constant 3 : index
    %c0_8 = arith.constant 0 : index
    %8 = vector.load %arg7[%c3, %c0_8] : memref<5x32xf32, #tpu.memory_space<vmem>>, vector<2x32xf32>
    tpu.vector_store %arg7[%c3, %c0_8], %5 {strides = array<i32>} : memref<5x32xf32, #tpu.memory_space<vmem>>, vector<2x32xf32>,
    %c0_9 = arith.constant 0 : index
    %c0_10 = arith.constant 0 : index
    %9 = vector.load %arg0[%c0_9, %c0_10] : memref<16x5xf32, #tpu.memory_space<vmem>>, vector<16x5xf32>
    %c0_11 = arith.constant 0 : index
    %c0_12 = arith.constant 0 : index
    %10 = vector.load %arg7[%c0_11, %c0_12] : memref<5x32xf32, #tpu.memory_space<vmem>>, vector<5x32xf32>
    %cst_13 = arith.constant dense<0.000000e+00> : vector<16x32xf32>
    %11 = tpu.matmul %9, %10, %cst_13 {dimension_numbers = #tpu.dot_dimension_numbers<[1], [0], [0], [1], [0, 0, 1, 1], [], []>} : vector<16x5xf32>, vector<5x32xf32>, vector<16x32xf32> -> vector<16x32xf32>
    %cst_14 = arith.constant 0.000000e+00 : f32
    %12 = vector.broadcast %cst_14 : f32 to vector<16x32xf32>
    %13 = arith.maximumf %11, %12 : vector<16x32xf32>
    %c0_15 = arith.constant 0 : index
    %c0_16 = arith.constant 0 : index
    %c0_17 = arith.constant 0 : index
    %14 = vector.load %arg3[%c0_15, %c0_16, %c0_17] : memref<3x32x32xf32, #tpu.memory_space<vmem>>, vector<1x32x32xf32>
    %15 = vector.shape_cast %14 : vector<1x32x32xf32> to vector<32x32xf32>
    %cst_18 = arith.constant dense<0.000000e+00> : vector<16x32xf32>
    %16 = tpu.matmul %13, %15, %cst_18 {dimension_numbers = #tpu.dot_dimension_numbers<[1], [0], [0], [1], [0, 0, 1, 1], [], []>} : vector<16x32xf32>, vector<32x32xf32>, vector<16x32xf32> -> vector<16x32xf32>
    %c1 = arith.constant 1 : index
    %c0_19 = arith.constant 0 : index
    %17 = vector.load %arg5[%c1, %c0_19] : memref<5x32xf32, #tpu.memory_space<vmem>>, vector<1x32xf32>
    %18 = vector.broadcast %17 : vector<1x32xf32> to vector<16x32xf32>
    %19 = arith.addf %16, %18 : vector<16x32xf32>
    %cst_20 = arith.constant 0.000000e+00 : f32
    %20 = vector.broadcast %cst_20 : f32 to vector<16x32xf32>
    %21 = arith.maximumf %19, %20 : vector<16x32xf32>
    %c1_21 = arith.constant 1 : index
    %c0_22 = arith.constant 0 : index
    %c0_23 = arith.constant 0 : index
    %22 = vector.load %arg3[%c1_21, %c0_22, %c0_23] : memref<3x32x32xf32, #tpu.memory_space<vmem>>, vector<1x32x32xf32>
    %23 = vector.shape_cast %22 : vector<1x32x32xf32> to vector<32x32xf32>
    %cst_24 = arith.constant dense<0.000000e+00> : vector<16x32xf32>
    %24 = tpu.matmul %21, %23, %cst_24 {dimension_numbers = #tpu.dot_dimension_numbers<[1], [0], [0], [1], [0, 0, 1, 1], [], []>} : vector<16x32xf32>, vector<32x32xf32>, vector<16x32xf32> -> vector<16x32xf32>
    %c2 = arith.constant 2 : index
    %c0_25 = arith.constant 0 : index
    %25 = vector.load %arg5[%c2, %c0_25] : memref<5x32xf32, #tpu.memory_space<vmem>>, vector<1x32xf32>
    %26 = vector.broadcast %25 : vector<1x32xf32> to vector<16x32xf32>
    %27 = arith.addf %24, %26 : vector<16x32xf32>
    %cst_26 = arith.constant 0.000000e+00 : f32
    %28 = vector.broadcast %cst_26 : f32 to vector<16x32xf32>
    %29 = arith.maximumf %27, %28 : vector<16x32xf32>
    %c2_27 = arith.constant 2 : index
    %c0_28 = arith.constant 0 : index
    %c0_29 = arith.constant 0 : index
    %30 = vector.load %arg3[%c2_27, %c0_28, %c0_29] : memref<3x32x32xf32, #tpu.memory_space<vmem>>, vector<1x32x32xf32>
    %31 = vector.shape_cast %30 : vector<1x32x32xf32> to vector<32x32xf32>
    %cst_30 = arith.constant dense<0.000000e+00> : vector<16x32xf32>
    %32 = tpu.matmul %29, %31, %cst_30 {dimension_numbers = #tpu.dot_dimension_numbers<[1], [0], [0], [1], [0, 0, 1, 1], [], []>} : vector<16x32xf32>, vector<32x32xf32>, vector<16x32xf32> -> vector<16x32xf32>
    %c3_31 = arith.constant 3 : index
    %c0_32 = arith.constant 0 : index
    %33 = vector.load %arg5[%c3_31, %c0_32] : memref<5x32xf32, #tpu.memory_space<vmem>>, vector<1x32xf32>
    %34 = vector.broadcast %33 : vector<1x32xf32> to vector<16x32xf32>
    %35 = arith.addf %32, %34 : vector<16x32xf32>
    %cst_33 = arith.constant 0.000000e+00 : f32
    %36 = vector.broadcast %cst_33 : f32 to vector<16x32xf32>
    %37 = arith.maximumf %35, %36 : vector<16x32xf32>
    %c0_34 = arith.constant 0 : index
    %c0_35 = arith.constant 0 : index
    %38 = vector.load %arg4[%c0_34, %c0_35] : memref<32x4xf32, #tpu.memory_space<vmem>>, vector<32x4xf32>
    %cst_36 = arith.constant dense<0.000000e+00> : vector<16x4xf32>
    %39 = tpu.matmul %37, %38, %cst_36 {dimension_numbers = #tpu.dot_dimension_numbers<[1], [0], [0], [1], [0, 0, 1, 1], [], []>} : vector<16x32xf32>, vector<32x4xf32>, vector<16x4xf32> -> vector<16x4xf32>
    %c4 = arith.constant 4 : index
    %c0_37 = arith.constant 0 : index
    %40 = vector.load %arg5[%c4, %c0_37] : memref<5x32xf32, #tpu.memory_space<vmem>>, vector<1x4xf32>
    %41 = vector.broadcast %40 : vector<1x4xf32> to vector<16x4xf32>
    %42 = arith.addf %39, %41 : vector<16x4xf32>
    %cst_38 = arith.constant 0.000000e+00 : f32
    %43 = vector.broadcast %cst_38 : f32 to vector<16x4xf32>
    %44 = arith.maximumf %42, %43 : vector<16x4xf32>
    %45 = math.absf %42 : vector<16x4xf32>
    %cst_39 = arith.constant 0.000000e+00 : f32
    %46 = vector.broadcast %cst_39 : f32 to vector<16x4xf32>
    %47 = arith.subf %46, %45 : vector<16x4xf32>
    %48 = math.exp %47 : vector<16x4xf32>
    %cst_40 = arith.constant 1.000000e+00 : f32
    %49 = vector.broadcast %cst_40 : f32 to vector<16x4xf32>
    %50 = arith.addf %49, %48 : vector<16x4xf32>
    %51 = math.log %50 : vector<16x4xf32>
    %52 = arith.addf %44, %51 : vector<16x4xf32>
    %53 = tpu.iota {dimensions = array<i32: 1>} : vector<16x4xi32>
    %c2_i32 = arith.constant 2 : i32
    %54 = vector.broadcast %c2_i32 : i32 to vector<16x4xi32>
    %55 = arith.cmpi slt, %53, %54 : vector<16x4xi32>
    %cst_41 = arith.constant 0.899999976 : f32
    %56 = vector.broadcast %cst_41 : f32 to vector<16x4xf32>
    %57 = arith.mulf %56, %52 : vector<16x4xf32>
    %cst_42 = arith.constant 1.000000e-01 : f32
    %58 = vector.broadcast %cst_42 : f32 to vector<16x4xf32>
    %59 = arith.addf %58, %57 : vector<16x4xf32>
    %60 = arith.select %55, %42, %59 : vector<16x4xi1>, vector<16x4xf32>
    %c0_43 = arith.constant 0 : index
    %c0_44 = arith.constant 0 : index
    %61 = vector.load %arg6[%c0_43, %c0_44] : memref<16x4xf32, #tpu.memory_space<vmem>>, vector<16x4xf32>
    tpu.vector_store %arg6[%c0_43, %c0_44], %60 {strides = array<i32>} : memref<16x4xf32, #tpu.memory_space<vmem>>, vector<16x4xf32>,
    return
  }
}

</mosaic_0001>

<llo_original>
// kernel: tpu_custom_call.1
$region0: #{tpu_custom_call.1}
  #allocation0 [shape = 'u32[]', space=smem, size = 0x4, offset = 0x4, fixed_abs, tag = 'smem constant byte address 0x4 - core index']
  #allocation1 [shape = 'u32[72,128]{1,0:T(1,128)}', space=vmem, size = 0x9000, scoped, tag = 'internal scratch']
  #allocation2 [shape = 'f32[5,32]{1,0:T(8,128)}', space=vmem, size = 0x1000, scoped, tag = 'scratch operand']
  %s0 = inlined_call_operand.vmem [shape: f32[16,5], index: 0, kind: input, shape index: {}]
  %s1 = inlined_call_operand.vmem [shape: f32[2,32], index: 1, kind: input, shape index: {}]
  %s2 = inlined_call_operand.vmem [shape: f32[35,32], index: 2, kind: input, shape index: {}]
  %s3 = inlined_call_operand.vmem [shape: f32[3,32,32], index: 3, kind: input, shape index: {}]
  %s4 = inlined_call_operand.vmem [shape: f32[32,4], index: 4, kind: input, shape index: {}]
  %s5 = inlined_call_operand.hbm [shape: f32[5,32], index: 5, kind: input, shape index: {}]
  %s6 = inlined_call_operand.vmem [shape: f32[16,4], index: 6, kind: output, shape index: {}]
  %s7 = sld [smem:[#allocation0]]
  $region38: #{tpu_custom_call.1} parent=0
    _
  %s9 = ssub.s32 1, %s7
  %s10 = scalar_select 0, %s9, %s7
  $region1: #{tpu_custom_call.1} parent=0
    #allocation3 [shape = 'u8[4096]{0}', space=vmem, size = 0x1000, scoped, tag = 'input window, operand 5, single buffered']
    #allocation4 [shape = 's32[1]{0}', space=sflag, size = 0x4, scoped, tag = 'scoped memory for tpu_custom_call.1']
    %11 = vsyncpa [#allocation4], 0
    // Predicated region
    $region2: #{tpu_custom_call.1} parent=1 // pred_check
      _
    $region3: #{tpu_custom_call.1} parent=1 // pred_check_branch
      %13 = sbr.rel (0) target = $region5
    $region4: #{tpu_custom_call.1} parent=1 // pred_region
      _
    $region5: #{tpu_custom_call.1} parent=1 // pred_fallthru
      _
    // Predicated region
    $region6: #{tpu_custom_call.1} parent=1 // pred_check
      _
    $region7: #{tpu_custom_call.1} parent=1 // pred_check_branch
      %15 = sbr.rel (0) target = $region9
    $region8: #{tpu_custom_call.1} parent=1 // pred_region
      _
    $region9: #{tpu_custom_call.1} parent=1 // pred_fallthru
      _
    // Predicated region
    $region10: #{tpu_custom_call.1} parent=1 // pred_check
      _
    $region11: #{tpu_custom_call.1} parent=1 // pred_check_branch
      %17 = sbr.rel (0) target = $region13
    $region12: #{tpu_custom_call.1} parent=1 // pred_region
      _
    $region13: #{tpu_custom_call.1} parent=1 // pred_fallthru
      _
    // Predicated region
    $region14: #{tpu_custom_call.1} parent=1 // pred_check
      _
    $region15: #{tpu_custom_call.1} parent=1 // pred_check_branch
      %19 = sbr.rel (0) target = $region17
    $region16: #{tpu_custom_call.1} parent=1 // pred_region
      _
    $region17: #{tpu_custom_call.1} parent=1 // pred_fallthru
      _
    // Predicated region
    $region18: #{tpu_custom_call.1} parent=1 // pred_check
      _
    $region19: #{tpu_custom_call.1} parent=1 // pred_check_branch
      %21 = sbr.rel (0) target = $region21
    $region20: #{tpu_custom_call.1} parent=1 // pred_region
      _
    $region21: #{tpu_custom_call.1} parent=1 // pred_fallthru
      _
    // Predicated region
    $region22: #{tpu_custom_call.1} parent=1 // pred_check
      _
    $region23: #{tpu_custom_call.1} parent=1 // pred_check_branch
      %23 = sbr.rel (0) target = $region25
    $region24: #{tpu_custom_call.1} parent=1 // pred_region
      %25 = vsyncadd [#allocation4], 0
      %s27 = sshll.u32 %s5, 4
      %s28 = int_to_ptr.hbm [resolvable:$true] %s27
      %s29 = sshll.u32 [#allocation3], 4
      %s30 = int_to_ptr.vmem [resolvable:$true] %s29
      %32 = dma.hbm_to_vmem [thread:$0]  %s28, 128, %s30, [#allocation4]
    $region25: #{tpu_custom_call.1} parent=1 // pred_fallthru
      _
    // Predicated region
    $region26: #{tpu_custom_call.1} parent=1 // pred_check
      _
    $region27: #{tpu_custom_call.1} parent=1 // pred_check_branch
      %34 = sbr.rel (0) target = $region29
    $region28: #{tpu_custom_call.1} parent=1 // pred_region
      %36 = dma.done [#allocation4], 128
    $region29: #{tpu_custom_call.1} parent=1 // pred_fallthru
      _
    %v37 = vld [vmem:[%s1] sm:$0x3]
    %v38 = vld [vmem:[%s2] sm:$0xff]
    %v39 = vld [vmem:[%s2 + $0x8] sm:$0xff]
    %v40 = vld [vmem:[%s2 + $0x10] sm:$0xff]
    %v41 = vld [vmem:[%s2 + $0x18] sm:$0xff]
    %v42 = vld [vmem:[#allocation3] sm:$0x1]
    %v43 = vperm.slane %v42, 0
    %vm44 = vcmask 261120
    %v46 = vsel %vm44, %v37, 0
    %48 = vmatpush.msra.mxu0 0.0
    %49 = vmatpush.msra.mxu0 0.0
    %50 = vmatpush.msra.mxu0 0.0
    %51 = vmatpush.msra.mxu0 0.0
    %52 = vmatpush.msra.mxu0 0.0
    %53 = vmatpush.msra.mxu0 0.0
    %54 = vmatpush.msra.mxu0 0.0
    %55 = vmatpush.msra.mxu0 0.0
    %56 = vmatpush.msra.mxu0 0.0
    %57 = vmatpush.msra.mxu0 0.0
    %58 = vmatpush.msra.mxu0 0.0
    %59 = vmatpush.msra.mxu0 0.0
    %60 = vmatpush.msra.mxu0 %v41
    %61 = vmatpush.msra.mxu0 %v40
    %62 = vmatpush.msra.mxu0 %v39
    %63 = vmatpush.msra.mxu0 %v38
    %64 = vmatmul.f32.gmra.mxu0 %v46
    %v65 = vpop.f32.mrf.mxu0
    %v66 = vadd.f32 %v43, %v65
    %67 = vdwg.mxu0
    %v68 = vld [vmem:[%s2 + $0x20] sm:$0x7]
    %vm69 = vcmask 256000
    %70 = vst.msk [vmem:[#allocation2] sm:$0x7] %vm69, %v68
    %vm71 = vcmask 254976
    %72 = vst.msk [vmem:[#allocation2 + $0x3] sm:$0x3] %vm71, %v66
    %v73 = vld [vmem:[%s0] sm:$0xff]
    %v74 = vld [vmem:[%s0 + $0x8] sm:$0xff]
    %v75 = vld [vmem:[#allocation2] sm:$0x1f]
    %vm76 = vcmask 39936
    %v78 = vsel %vm76, %v73, 0
    %v81 = vsel %vm76, %v74, 0
    %vm83 = vcmask 1044480
    %v85 = vsel %vm83, %v75, 0
    %87 = vmatpush.msra.mxu0 0.0
    %88 = vmatpush.msra.mxu0 0.0
    %89 = vmatpush.msra.mxu0 0.0
    %90 = vmatpush.msra.mxu0 0.0
    %91 = vmatpush.msra.mxu0 0.0
    %92 = vmatpush.msra.mxu0 0.0
    %93 = vmatpush.msra.mxu0 0.0
    %94 = vmatpush.msra.mxu0 0.0
    %95 = vmatpush.msra.mxu0 0.0
    %96 = vmatpush.msra.mxu0 0.0
    %97 = vmatpush.msra.mxu0 0.0
    %98 = vmatpush.msra.mxu0 0.0
    %99 = vmatpush.msra.mxu0 0.0
    %100 = vmatpush.msra.mxu0 0.0
    %101 = vmatpush.msra.mxu0 0.0
    %102 = vmatpush.msra.mxu0 %v85
    %103 = vmatmul.f32.gmra.mxu0 %v78
    %v104 = vpop.f32.mrf.mxu0
    %v105 = vadd.f32 0.0, %v104
    %106 = vmatmul.f32.gmra.mxu0 %v81
    %v107 = vpop.f32.mrf.mxu0
    %v108 = vadd.f32 0.0, %v107
    %109 = vdwg.mxu0
    %v110 = vmax.f32 %v105, 0.0
    %v111 = vmax.f32 %v108, 0.0
    %v112 = vld [vmem:[%s3] sm:$0xff]
    %v113 = vld [vmem:[%s3 + $0x8] sm:$0xff]
    %v114 = vld [vmem:[%s3 + $0x10] sm:$0xff]
    %v115 = vld [vmem:[%s3 + $0x18] sm:$0xff]
    %v116 = vld [vmem:[#allocation3 + $0x1] sm:$0x1]
    %v117 = vperm.slane %v116, 0
    %v119 = vsel %vm44, %v110, 0
    %v122 = vsel %vm44, %v111, 0
    %124 = vmatpush.msra.mxu0 0.0
    %125 = vmatpush.msra.mxu0 0.0
    %126 = vmatpush.msra.mxu0 0.0
    %127 = vmatpush.msra.mxu0 0.0
    %128 = vmatpush.msra.mxu0 0.0
    %129 = vmatpush.msra.mxu0 0.0
    %130 = vmatpush.msra.mxu0 0.0
    %131 = vmatpush.msra.mxu0 0.0
    %132 = vmatpush.msra.mxu0 0.0
    %133 = vmatpush.msra.mxu0 0.0
    %134 = vmatpush.msra.mxu0 0.0
    %135 = vmatpush.msra.mxu0 0.0
    %136 = vmatpush.msra.mxu0 %v115
    %137 = vmatpush.msra.mxu0 %v114
    %138 = vmatpush.msra.mxu0 %v113
    %139 = vmatpush.msra.mxu0 %v112
    %140 = vmatmul.f32.gmra.mxu0 %v119
    %v141 = vpop.f32.mrf.mxu0
    %v142 = vadd.f32 %v117, %v141
    %143 = vmatmul.f32.gmra.mxu0 %v122
    %v144 = vpop.f32.mrf.mxu0
    %v145 = vadd.f32 %v117, %v144
    %146 = vdwg.mxu0
    %v147 = vmax.f32 %v142, 0.0
    %v148 = vmax.f32 %v145, 0.0
    %s149 = scalar_lea.vmem %s3, 32
    %v150 = vld [vmem:[%s149] sm:$0xff]
    %v151 = vld [vmem:[%s149 + $0x8] sm:$0xff]
    %v152 = vld [vmem:[%s149 + $0x10] sm:$0xff]
    %v153 = vld [vmem:[%s149 + $0x18] sm:$0xff]
    %v154 = vld [vmem:[#allocation3 + $0x2] sm:$0x1]
    %v155 = vperm.slane %v154, 0
    %v157 = vsel %vm44, %v147, 0
    %v160 = vsel %vm44, %v148, 0
    %162 = vmatpush.msra.mxu0 0.0
    %163 = vmatpush.msra.mxu0 0.0
    %164 = vmatpush.msra.mxu0 0.0
    %165 = vmatpush.msra.mxu0 0.0
    %166 = vmatpush.msra.mxu0 0.0
    %167 = vmatpush.msra.mxu0 0.0
    %168 = vmatpush.msra.mxu0 0.0
    %169 = vmatpush.msra.mxu0 0.0
    %170 = vmatpush.msra.mxu0 0.0
    %171 = vmatpush.msra.mxu0 0.0
    %172 = vmatpush.msra.mxu0 0.0
    %173 = vmatpush.msra.mxu0 0.0
    %174 = vmatpush.msra.mxu0 %v153
    %175 = vmatpush.msra.mxu0 %v152
    %176 = vmatpush.msra.mxu0 %v151
    %177 = vmatpush.msra.mxu0 %v150
    %178 = vmatmul.f32.gmra.mxu0 %v157
    %v179 = vpop.f32.mrf.mxu0
    %v180 = vadd.f32 %v155, %v179
    %181 = vmatmul.f32.gmra.mxu0 %v160
    %v182 = vpop.f32.mrf.mxu0
    %v183 = vadd.f32 %v155, %v182
    %184 = vdwg.mxu0
    %v185 = vmax.f32 %v180, 0.0
    %v186 = vmax.f32 %v183, 0.0
    %s187 = scalar_lea.vmem %s3, 64
    %v188 = vld [vmem:[%s187] sm:$0xff]
    %v189 = vld [vmem:[%s187 + $0x8] sm:$0xff]
    %v190 = vld [vmem:[%s187 + $0x10] sm:$0xff]
    %v191 = vld [vmem:[%s187 + $0x18] sm:$0xff]
    %v192 = vld [vmem:[#allocation3 + $0x3] sm:$0x1]
    %v193 = vperm.slane %v192, 0
    %v195 = vsel %vm44, %v185, 0
    %v198 = vsel %vm44, %v186, 0
    %200 = vmatpush.msra.mxu0 0.0
    %201 = vmatpush.msra.mxu0 0.0
    %202 = vmatpush.msra.mxu0 0.0
    %203 = vmatpush.msra.mxu0 0.0
    %204 = vmatpush.msra.mxu0 0.0
    %205 = vmatpush.msra.mxu0 0.0
    %206 = vmatpush.msra.mxu0 0.0
    %207 = vmatpush.msra.mxu0 0.0
    %208 = vmatpush.msra.mxu0 0.0
    %209 = vmatpush.msra.mxu0 0.0
    %210 = vmatpush.msra.mxu0 0.0
    %211 = vmatpush.msra.mxu0 0.0
    %212 = vmatpush.msra.mxu0 %v191
    %213 = vmatpush.msra.mxu0 %v190
    %214 = vmatpush.msra.mxu0 %v189
    %215 = vmatpush.msra.mxu0 %v188
    %216 = vmatmul.f32.gmra.mxu0 %v195
    %v217 = vpop.f32.mrf.mxu0
    %v218 = vadd.f32 %v193, %v217
    %219 = vmatmul.f32.gmra.mxu0 %v198
    %v220 = vpop.f32.mrf.mxu0
    %v221 = vadd.f32 %v193, %v220
    %222 = vdwg.mxu0
    %v223 = vmax.f32 %v218, 0.0
    %v224 = vmax.f32 %v221, 0.0
    %v225 = vld [vmem:[%s4] sm:$0xff]
    %v226 = vld [vmem:[%s4 + $0x8] sm:$0xff]
    %v227 = vld [vmem:[%s4 + $0x10] sm:$0xff]
    %v228 = vld [vmem:[%s4 + $0x18] sm:$0xff]
    %v229 = vld [vmem:[#allocation3 + $0x4] sm:$0x1]
    %v230 = vperm.slane %v229, 0
    %v232 = vsel %vm44, %v223, 0
    %v235 = vsel %vm44, %v224, 0
    %237 = vmatpush.msra.mxu0 0.0
    %238 = vmatpush.msra.mxu0 0.0
    %239 = vmatpush.msra.mxu0 0.0
    %240 = vmatpush.msra.mxu0 0.0
    %241 = vmatpush.msra.mxu0 0.0
    %242 = vmatpush.msra.mxu0 0.0
    %243 = vmatpush.msra.mxu0 0.0
    %244 = vmatpush.msra.mxu0 0.0
    %245 = vmatpush.msra.mxu0 0.0
    %246 = vmatpush.msra.mxu0 0.0
    %247 = vmatpush.msra.mxu0 0.0
    %248 = vmatpush.msra.mxu0 0.0
    %249 = vmatpush.msra.mxu0 %v228
    %250 = vmatpush.msra.mxu0 %v227
    %251 = vmatpush.msra.mxu0 %v226
    %252 = vmatpush.msra.mxu0 %v225
    %253 = vmatmul.f32.gmra.mxu0 %v232
    %v254 = vpop.f32.mrf.mxu0
    %v255 = vadd.f32 %v230, %v254
    %256 = vmatmul.f32.gmra.mxu0 %v235
    %v257 = vpop.f32.mrf.mxu0
    %v258 = vadd.f32 %v230, %v257
    %259 = vdwg.mxu0
    %v260 = vmax.f32 %v255, 0.0
    %v261 = vmax.f32 %v258, 0.0
    %v262 = vand.u32 2147483647, %v255
    %v263 = vand.u32 2147483647, %v258
    %v264 = vsub.f32 0.0, %v262
    %v265 = vsub.f32 0.0, %v263
    %v266 = vmul.f32 %v264, 1.442695
    %v267 = vpow.pop %v266
    %v268 = vmul.f32 %v265, 1.442695
    %v269 = vpow.pop %v268
    %v270 = vadd.f32 %v267, 1.0
    %v271 = vadd.f32 %v269, 1.0
    %v272 = vlog2.pop %v270
    %v273 = vmul.f32 %v272, 0.6931472
    %v274 = vlog2.pop %v271
    %v275 = vmul.f32 %v274, 0.6931472
    %v276 = vadd.f32 %v260, %v273
    %v277 = vadd.f32 %v261, %v275
    %v278 = vlaneseq
    %v279 = vand.u32 %v278, 127
    %vm280 = vcmp.lt.s32.totalorder %v279, 2
    %v281 = vmul.f32 %v276, 0.9
    %v282 = vmul.f32 %v277, 0.9
    %v283 = vadd.f32 %v281, 0.1
    %v284 = vadd.f32 %v282, 0.1
    %v285 = vsel %vm280, %v255, %v283
    %v286 = vsel %vm280, %v258, %v284
    %vm287 = vcmask 31744
    %288 = vst.msk [vmem:[%s6] sm:$0xff] %vm287, %v285
    %289 = vst.msk [vmem:[%s6 + $0x8] sm:$0xff] %vm287, %v286
    // Predicated region
    $region30: #{tpu_custom_call.1} parent=1 // pred_check
      _
    $region31: #{tpu_custom_call.1} parent=1 // pred_check_branch
      %291 = sbr.rel (0) target = $region33
    $region32: #{tpu_custom_call.1} parent=1 // pred_region
      _
    $region33: #{tpu_custom_call.1} parent=1 // pred_fallthru
      _
    // Predicated region
    $region34: #{tpu_custom_call.1} parent=1 // pred_check
      _
    $region35: #{tpu_custom_call.1} parent=1 // pred_check_branch
      %293 = sbr.rel (0) target = $region37
    $region36: #{tpu_custom_call.1} parent=1 // pred_region
      _
    $region37: #{tpu_custom_call.1} parent=1 // pred_fallthru
      _
    %294 = vsyncpa [#allocation4], 1

</llo_original>
